<compile_context>
chip_gen: v5e
topology: v5e:2x2
jax: 0.10.0
libtpu: 0.0.40
codegen_flags: <defaults>
</compile_context>

<pallas_src>
import jax
import jax.numpy as jnp
import numpy as np
from jax.experimental import pallas as pl
from jax.experimental.pallas import tpu as pltpu


def _build_cross_indices(num_fields):
    pairs = []
    for i in range(num_fields - 1):
        for j in range(i + 1, num_fields):
            pairs.append((i, j))
    return tuple(pairs)


def _make_afm_kernel(pairs, emb_dim):
    P = len(pairs)
    E = emb_dim

    def kernel(feat_ref, aw_ref, misc_ref, o_ref):
        # feat_ref : (TB, F*E)  batch tile, fields packed along lanes
        # aw_ref   : (A, E)     att_weights (VMEM-resident, constant index_map)
        # misc_ref : (4, P)     rows = [att_bias, att_h_weights, pair_w, [pair_b, 0, ...]]
        # o_ref    : (1, TB)    lane-dense per-example outputs
        feat = feat_ref[...].astype(jnp.float32)        # single upcast (bf16-friendly)
        aw = aw_ref[...]                                # (A, E)
        misc = misc_ref[...]                            # (4, P)
        ab_row = misc[0:1, :]                           # (1, P) bias indexed by pair (A==P quirk)
        ah_row = misc[1:2, :]                           # (1, A)
        w_row = misc[2:3, :]                            # (1, P)
        b_lin = misc[3:4, 0:1]                          # (1, 1)

        sig_cols, rs_cols = [], []
        for k, (i, j) in enumerate(pairs):              # static unroll over the pairs
            pw = feat[:, i * E:(i + 1) * E] * feat[:, j * E:(j + 1) * E]       # (TB, E)
            # attention[:, :, k] = pw @ att_weights.T  -> tall-M MXU matmul, f32 acc
            att = jax.lax.dot_general(pw, aw, (((1,), (1,)), ((), ())),
                                      preferred_element_type=jnp.float32)      # (TB, A)
            att = jnp.maximum(att + ab_row[:, k:k + 1], 0.0)                    # + bias[pair], ReLU
            # att_signal[:, k] = att_h_weights . attention[:, :, k]  (VPU mult + lane reduce)
            sig_cols.append(jnp.sum(att * ah_row, axis=-1, keepdims=True))      # (TB, 1)
            rs_cols.append(jnp.sum(pw, axis=-1, keepdims=True))                 # (TB, 1)

        sig = jnp.concatenate(sig_cols, axis=-1)        # (TB, P)
        rs = jnp.concatenate(rs_cols, axis=-1)          # (TB, P)

        # softmax over the pair axis
        sig = sig - jnp.max(sig, axis=-1, keepdims=True)
        sig = jnp.exp(sig)
        sig = sig / jnp.sum(sig, axis=-1, keepdims=True)

        weighted = sig * rs                             # (TB, P)
        # Linear(num_pairs -> 1): out[0, b] = sum_p w[p] * weighted[b, p]  (lane-dense result)
        out = jax.lax.dot_general(w_row, weighted, (((1,), (1,)), ((), ())),
                                  preferred_element_type=jnp.float32)          # (1, TB)
        o_ref[...] = out + b_lin

    return kernel


def _round_up(x, m):
    return (x + m - 1) // m * m


def afm_attention_forward(feat_emb, params, *, batch_tile=512):
    """Pallas forward of AttentionPairWiseInteractionLayer.  feat_emb: (B, F, E)."""
    B, F, E = feat_emb.shape
    pairs = _build_cross_indices(F)
    P = len(pairs)

    aw = params["att_weights"].astype(jnp.float32)      # (A, E)
    A = aw.shape[0]
    # PyTorch adds att_bias (len A) along the num_pairs axis -> only legal when A == P.
    assert A == P, "att_weight_dim must equal num_pairs (PyTorch bias-broadcast quirk)"

    # Pack the small parameters into one VMEM-resident operand.
    misc = jnp.zeros((4, P), jnp.float32)
    misc = misc.at[0, :].set(params["att_bias"].reshape(A).astype(jnp.float32))
    misc = misc.at[1, :].set(params["att_h_weights"].reshape(A).astype(jnp.float32))
    misc = misc.at[2, :].set(params["pair_w"].reshape(P).astype(jnp.float32))
    misc = misc.at[3, 0].set(params["pair_b"].reshape(()).astype(jnp.float32))

    FE = F * E
    feat2d = feat_emb.reshape(B, FE)                    # free row-major reshape, keeps dtype

    # Batch tile: multiple of 8 sublanes; capped (fits v7x's smaller VMEM comfortably).
    TB = min(batch_tile, _round_up(B, 8))
    B_pad = _round_up(B, TB)
    if B_pad != B:
        feat2d = jnp.pad(feat2d, ((0, B_pad - B), (0, 0)))   # padded rows sliced off below
    num_blocks = B_pad // TB

    out2d = pl.pallas_call(
        _make_afm_kernel(pairs, E),
        out_shape=jax.ShapeDtypeStruct((num_blocks, TB), jnp.float32),
        grid_spec=pltpu.PrefetchScalarGridSpec(
            num_scalar_prefetch=0,
            grid=(num_blocks,),
            in_specs=[
                pl.BlockSpec((TB, FE), lambda bi: (bi, 0)),   # feat tile (batch on sublanes)
                pl.BlockSpec((A, E), lambda bi: (0, 0)),      # att_weights (constant -> no re-DMA)
                pl.BlockSpec((4, P), lambda bi: (0, 0)),      # packed small params
            ],
            out_specs=pl.BlockSpec((1, TB), lambda bi: (bi, 0)),  # lane-dense output block
        ),
        compiler_params=pltpu.CompilerParams(
            dimension_semantics=("parallel",)),               # batch blocks shard across TCs (v7x)
    )(feat2d, aw, misc)

    return out2d.reshape(B_pad)[:B].reshape(B, 1)


def reference_forward(feat_emb, params):
    """Pure-JAX reference mirroring the PyTorch forward exactly."""
    B, F, E = feat_emb.shape
    pairs = _build_cross_indices(F)
    rows = jnp.asarray([i for i, _ in pairs], jnp.int32)
    cols = jnp.asarray([j for _, j in pairs], jnp.int32)
    p = feat_emb[:, rows, :].astype(jnp.float32)
    q = feat_emb[:, cols, :].astype(jnp.float32)
    pw = p * q                                              # (B, P, E)
    att = jnp.einsum('ae,bpe->bap', params["att_weights"], pw)   # (B, A, P)
    att = att + params["att_bias"]                          # broadcast over last axis (quirk)
    att = jnp.maximum(att, 0.0)
    sig = jnp.einsum('a,bap->bp', params["att_h_weights"], att)  # (B, P)
    sig = jax.nn.softmax(sig, axis=-1)
    att_pw = sig[:, :, None] * pw                           # (B, P, E)
    s = jnp.sum(att_pw, axis=2)                             # (B, P)
    return s @ params["pair_w"].T + params["pair_b"]        # (B, 1)


if __name__ == "__main__":
    B, num_fields, emb_dim = 2, 4, 32
    num_pairs = num_fields * (num_fields - 1) // 2          # 6
    att_weight_dim = num_pairs                              # required by the bias broadcast

    key = jax.random.PRNGKey(0)
    k1, k2, k3, k4, k5, k6 = jax.random.split(key, 6)
    bound = 1.0 / np.sqrt(num_pairs)
    params = {
        # deterministic synthetic init (module uses randn / nn.Linear default init)
        "att_weights": 0.1 * jax.random.normal(k1, (att_weight_dim, emb_dim), jnp.float32),
        "att_bias": 0.1 * jax.random.normal(k2, (att_weight_dim,), jnp.float32),
        "att_h_weights": 0.1 * jax.random.normal(k3, (att_weight_dim,), jnp.float32),
        "pair_w": jax.random.uniform(k4, (1, num_pairs), jnp.float32, -bound, bound),
        "pair_b": jax.random.uniform(k5, (1,), jnp.float32, -bound, bound),
    }
    feat_emb_value = jax.random.normal(k6, (B, num_fields, emb_dim), jnp.float32)

    out = afm_attention_forward(feat_emb_value, params)
    out = jax.block_until_ready(out)

    ref = reference_forward(feat_emb_value, params)
    np.testing.assert_allclose(np.asarray(out), np.asarray(ref), rtol=2e-2, atol=2e-2)
    print("KERNEL_OK")
</pallas_src>

<mosaic_0001>
module attributes {stable_mosaic.version = 11 : i64} {
  func.func @kernel(%arg0: i32, %arg1: memref<8x128xf32, #tpu.memory_space<vmem>>, %arg2: memref<6x32xf32, #tpu.memory_space<vmem>>, %arg3: memref<4x6xf32, #tpu.memory_space<vmem>>, %arg4: memref<1x8xf32, #tpu.memory_space<vmem>>) attributes {dimension_semantics = [#tpu.dimension_semantics<parallel>], iteration_bounds = array<i64: 1>, scalar_prefetch = 0 : i64, scratch_operands = 0 : i64, tpu.core_type = #tpu.core_type<tc>, window_params = [{transform_indices = @transform_0, window_bounds = array<i64: 8, 128>}, {pipeline_mode = #tpu.pipeline_mode<synchronous>, transform_indices = @transform_1, window_bounds = array<i64: 6, 32>}, {pipeline_mode = #tpu.pipeline_mode<synchronous>, transform_indices = @transform_2, window_bounds = array<i64: 4, 6>}, {transform_indices = @transform_3, window_bounds = array<i64: 1, 8>}]} {
    %c0 = arith.constant 0 : index
    %c0_0 = arith.constant 0 : index
    %0 = vector.load %arg1[%c0, %c0_0] : memref<8x128xf32, #tpu.memory_space<vmem>>, vector<8x128xf32>
    %c0_1 = arith.constant 0 : index
    %c0_2 = arith.constant 0 : index
    %1 = vector.load %arg2[%c0_1, %c0_2] : memref<6x32xf32, #tpu.memory_space<vmem>>, vector<6x32xf32>
    %c0_3 = arith.constant 0 : index
    %c0_4 = arith.constant 0 : index
    %2 = vector.load %arg3[%c0_3, %c0_4] : memref<4x6xf32, #tpu.memory_space<vmem>>, vector<4x6xf32>
    %3 = vector.extract_strided_slice %2 {offsets = [0, 0], sizes = [1, 6], strides = [1, 1]} : vector<4x6xf32> to vector<1x6xf32>
    %4 = vector.extract_strided_slice %2 {offsets = [1, 0], sizes = [1, 6], strides = [1, 1]} : vector<4x6xf32> to vector<1x6xf32>
    %5 = vector.extract_strided_slice %2 {offsets = [2, 0], sizes = [1, 6], strides = [1, 1]} : vector<4x6xf32> to vector<1x6xf32>
    %6 = vector.extract_strided_slice %2 {offsets = [3, 0], sizes = [1, 1], strides = [1, 1]} : vector<4x6xf32> to vector<1x1xf32>
    %7 = vector.extract_strided_slice %0 {offsets = [0, 0], sizes = [8, 32], strides = [1, 1]} : vector<8x128xf32> to vector<8x32xf32>
    %8 = vector.extract_strided_slice %0 {offsets = [0, 32], sizes = [8, 32], strides = [1, 1]} : vector<8x128xf32> to vector<8x32xf32>
    %9 = arith.mulf %7, %8 : vector<8x32xf32>
    %cst = arith.constant dense<0.000000e+00> : vector<8x6xf32>
    %10 = tpu.matmul %9, %1, %cst {dimension_numbers = #tpu.dot_dimension_numbers<[1], [1], [0], [0], [0, 0, 1, 0], [], []>} : vector<8x32xf32>, vector<6x32xf32>, vector<8x6xf32> -> vector<8x6xf32>
    %11 = vector.extract_strided_slice %3 {offsets = [0, 0], sizes = [1, 1], strides = [1, 1]} : vector<1x6xf32> to vector<1x1xf32>
    %12 = vector.broadcast %11 : vector<1x1xf32> to vector<8x6xf32>
    %13 = arith.addf %10, %12 : vector<8x6xf32>
    %cst_5 = arith.constant 0.000000e+00 : f32
    %14 = vector.broadcast %cst_5 : f32 to vector<8x6xf32>
    %15 = arith.maximumf %13, %14 : vector<8x6xf32>
    %16 = vector.broadcast %4 : vector<1x6xf32> to vector<8x6xf32>
    %17 = arith.mulf %15, %16 : vector<8x6xf32>
    %cst_6 = arith.constant dense<0.000000e+00> : vector<8xf32>
    %18 = vector.multi_reduction <add>, %17, %cst_6 [1] : vector<8x6xf32> to vector<8xf32>
    %19 = vector.shape_cast %18 : vector<8xf32> to vector<8x1xf32>
    %cst_7 = arith.constant dense<0.000000e+00> : vector<8xf32>
    %20 = vector.multi_reduction <add>, %9, %cst_7 [1] : vector<8x32xf32> to vector<8xf32>
    %21 = vector.shape_cast %20 : vector<8xf32> to vector<8x1xf32>
    %22 = vector.extract_strided_slice %0 {offsets = [0, 0], sizes = [8, 32], strides = [1, 1]} : vector<8x128xf32> to vector<8x32xf32>
    %23 = vector.extract_strided_slice %0 {offsets = [0, 64], sizes = [8, 32], strides = [1, 1]} : vector<8x128xf32> to vector<8x32xf32>
    %24 = arith.mulf %22, %23 : vector<8x32xf32>
    %cst_8 = arith.constant dense<0.000000e+00> : vector<8x6xf32>
    %25 = tpu.matmul %24, %1, %cst_8 {dimension_numbers = #tpu.dot_dimension_numbers<[1], [1], [0], [0], [0, 0, 1, 0], [], []>} : vector<8x32xf32>, vector<6x32xf32>, vector<8x6xf32> -> vector<8x6xf32>
    %26 = vector.extract_strided_slice %3 {offsets = [0, 1], sizes = [1, 1], strides = [1, 1]} : vector<1x6xf32> to vector<1x1xf32>
    %27 = vector.broadcast %26 : vector<1x1xf32> to vector<8x6xf32>
    %28 = arith.addf %25, %27 : vector<8x6xf32>
    %cst_9 = arith.constant 0.000000e+00 : f32
    %29 = vector.broadcast %cst_9 : f32 to vector<8x6xf32>
    %30 = arith.maximumf %28, %29 : vector<8x6xf32>
    %31 = vector.broadcast %4 : vector<1x6xf32> to vector<8x6xf32>
    %32 = arith.mulf %30, %31 : vector<8x6xf32>
    %cst_10 = arith.constant dense<0.000000e+00> : vector<8xf32>
    %33 = vector.multi_reduction <add>, %32, %cst_10 [1] : vector<8x6xf32> to vector<8xf32>
    %34 = vector.shape_cast %33 : vector<8xf32> to vector<8x1xf32>
    %cst_11 = arith.constant dense<0.000000e+00> : vector<8xf32>
    %35 = vector.multi_reduction <add>, %24, %cst_11 [1] : vector<8x32xf32> to vector<8xf32>
    %36 = vector.shape_cast %35 : vector<8xf32> to vector<8x1xf32>
    %37 = vector.extract_strided_slice %0 {offsets = [0, 0], sizes = [8, 32], strides = [1, 1]} : vector<8x128xf32> to vector<8x32xf32>
    %38 = vector.extract_strided_slice %0 {offsets = [0, 96], sizes = [8, 32], strides = [1, 1]} : vector<8x128xf32> to vector<8x32xf32>
    %39 = arith.mulf %37, %38 : vector<8x32xf32>
    %cst_12 = arith.constant dense<0.000000e+00> : vector<8x6xf32>
    %40 = tpu.matmul %39, %1, %cst_12 {dimension_numbers = #tpu.dot_dimension_numbers<[1], [1], [0], [0], [0, 0, 1, 0], [], []>} : vector<8x32xf32>, vector<6x32xf32>, vector<8x6xf32> -> vector<8x6xf32>
    %41 = vector.extract_strided_slice %3 {offsets = [0, 2], sizes = [1, 1], strides = [1, 1]} : vector<1x6xf32> to vector<1x1xf32>
    %42 = vector.broadcast %41 : vector<1x1xf32> to vector<8x6xf32>
    %43 = arith.addf %40, %42 : vector<8x6xf32>
    %cst_13 = arith.constant 0.000000e+00 : f32
    %44 = vector.broadcast %cst_13 : f32 to vector<8x6xf32>
    %45 = arith.maximumf %43, %44 : vector<8x6xf32>
    %46 = vector.broadcast %4 : vector<1x6xf32> to vector<8x6xf32>
    %47 = arith.mulf %45, %46 : vector<8x6xf32>
    %cst_14 = arith.constant dense<0.000000e+00> : vector<8xf32>
    %48 = vector.multi_reduction <add>, %47, %cst_14 [1] : vector<8x6xf32> to vector<8xf32>
    %49 = vector.shape_cast %48 : vector<8xf32> to vector<8x1xf32>
    %cst_15 = arith.constant dense<0.000000e+00> : vector<8xf32>
    %50 = vector.multi_reduction <add>, %39, %cst_15 [1] : vector<8x32xf32> to vector<8xf32>
    %51 = vector.shape_cast %50 : vector<8xf32> to vector<8x1xf32>
    %52 = vector.extract_strided_slice %0 {offsets = [0, 32], sizes = [8, 32], strides = [1, 1]} : vector<8x128xf32> to vector<8x32xf32>
    %53 = vector.extract_strided_slice %0 {offsets = [0, 64], sizes = [8, 32], strides = [1, 1]} : vector<8x128xf32> to vector<8x32xf32>
    %54 = arith.mulf %52, %53 : vector<8x32xf32>
    %cst_16 = arith.constant dense<0.000000e+00> : vector<8x6xf32>
    %55 = tpu.matmul %54, %1, %cst_16 {dimension_numbers = #tpu.dot_dimension_numbers<[1], [1], [0], [0], [0, 0, 1, 0], [], []>} : vector<8x32xf32>, vector<6x32xf32>, vector<8x6xf32> -> vector<8x6xf32>
    %56 = vector.extract_strided_slice %3 {offsets = [0, 3], sizes = [1, 1], strides = [1, 1]} : vector<1x6xf32> to vector<1x1xf32>
    %57 = vector.broadcast %56 : vector<1x1xf32> to vector<8x6xf32>
    %58 = arith.addf %55, %57 : vector<8x6xf32>
    %cst_17 = arith.constant 0.000000e+00 : f32
    %59 = vector.broadcast %cst_17 : f32 to vector<8x6xf32>
    %60 = arith.maximumf %58, %59 : vector<8x6xf32>
    %61 = vector.broadcast %4 : vector<1x6xf32> to vector<8x6xf32>
    %62 = arith.mulf %60, %61 : vector<8x6xf32>
    %cst_18 = arith.constant dense<0.000000e+00> : vector<8xf32>
    %63 = vector.multi_reduction <add>, %62, %cst_18 [1] : vector<8x6xf32> to vector<8xf32>
    %64 = vector.shape_cast %63 : vector<8xf32> to vector<8x1xf32>
    %cst_19 = arith.constant dense<0.000000e+00> : vector<8xf32>
    %65 = vector.multi_reduction <add>, %54, %cst_19 [1] : vector<8x32xf32> to vector<8xf32>
    %66 = vector.shape_cast %65 : vector<8xf32> to vector<8x1xf32>
    %67 = vector.extract_strided_slice %0 {offsets = [0, 32], sizes = [8, 32], strides = [1, 1]} : vector<8x128xf32> to vector<8x32xf32>
    %68 = vector.extract_strided_slice %0 {offsets = [0, 96], sizes = [8, 32], strides = [1, 1]} : vector<8x128xf32> to vector<8x32xf32>
    %69 = arith.mulf %67, %68 : vector<8x32xf32>
    %cst_20 = arith.constant dense<0.000000e+00> : vector<8x6xf32>
    %70 = tpu.matmul %69, %1, %cst_20 {dimension_numbers = #tpu.dot_dimension_numbers<[1], [1], [0], [0], [0, 0, 1, 0], [], []>} : vector<8x32xf32>, vector<6x32xf32>, vector<8x6xf32> -> vector<8x6xf32>
    %71 = vector.extract_strided_slice %3 {offsets = [0, 4], sizes = [1, 1], strides = [1, 1]} : vector<1x6xf32> to vector<1x1xf32>
    %72 = vector.broadcast %71 : vector<1x1xf32> to vector<8x6xf32>
    %73 = arith.addf %70, %72 : vector<8x6xf32>
    %cst_21 = arith.constant 0.000000e+00 : f32
    %74 = vector.broadcast %cst_21 : f32 to vector<8x6xf32>
    %75 = arith.maximumf %73, %74 : vector<8x6xf32>
    %76 = vector.broadcast %4 : vector<1x6xf32> to vector<8x6xf32>
    %77 = arith.mulf %75, %76 : vector<8x6xf32>
    %cst_22 = arith.constant dense<0.000000e+00> : vector<8xf32>
    %78 = vector.multi_reduction <add>, %77, %cst_22 [1] : vector<8x6xf32> to vector<8xf32>
    %79 = vector.shape_cast %78 : vector<8xf32> to vector<8x1xf32>
    %cst_23 = arith.constant dense<0.000000e+00> : vector<8xf32>
    %80 = vector.multi_reduction <add>, %69, %cst_23 [1] : vector<8x32xf32> to vector<8xf32>
    %81 = vector.shape_cast %80 : vector<8xf32> to vector<8x1xf32>
    %82 = vector.extract_strided_slice %0 {offsets = [0, 64], sizes = [8, 32], strides = [1, 1]} : vector<8x128xf32> to vector<8x32xf32>
    %83 = vector.extract_strided_slice %0 {offsets = [0, 96], sizes = [8, 32], strides = [1, 1]} : vector<8x128xf32> to vector<8x32xf32>
    %84 = arith.mulf %82, %83 : vector<8x32xf32>
    %cst_24 = arith.constant dense<0.000000e+00> : vector<8x6xf32>
    %85 = tpu.matmul %84, %1, %cst_24 {dimension_numbers = #tpu.dot_dimension_numbers<[1], [1], [0], [0], [0, 0, 1, 0], [], []>} : vector<8x32xf32>, vector<6x32xf32>, vector<8x6xf32> -> vector<8x6xf32>
    %86 = vector.extract_strided_slice %3 {offsets = [0, 5], sizes = [1, 1], strides = [1, 1]} : vector<1x6xf32> to vector<1x1xf32>
    %87 = vector.broadcast %86 : vector<1x1xf32> to vector<8x6xf32>
    %88 = arith.addf %85, %87 : vector<8x6xf32>
    %cst_25 = arith.constant 0.000000e+00 : f32
    %89 = vector.broadcast %cst_25 : f32 to vector<8x6xf32>
    %90 = arith.maximumf %88, %89 : vector<8x6xf32>
    %91 = vector.broadcast %4 : vector<1x6xf32> to vector<8x6xf32>
    %92 = arith.mulf %90, %91 : vector<8x6xf32>
    %cst_26 = arith.constant dense<0.000000e+00> : vector<8xf32>
    %93 = vector.multi_reduction <add>, %92, %cst_26 [1] : vector<8x6xf32> to vector<8xf32>
    %94 = vector.shape_cast %93 : vector<8xf32> to vector<8x1xf32>
    %cst_27 = arith.constant dense<0.000000e+00> : vector<8xf32>
    %95 = vector.multi_reduction <add>, %84, %cst_27 [1] : vector<8x32xf32> to vector<8xf32>
    %96 = vector.shape_cast %95 : vector<8xf32> to vector<8x1xf32>
    %97 = tpu.concatenate %19, %34, %49, %64, %79, %94 in 1 : vector<8x1xf32>, vector<8x1xf32>, vector<8x1xf32>, vector<8x1xf32>, vector<8x1xf32>, vector<8x1xf32> -> vector<8x6xf32>
    %98 = tpu.concatenate %21, %36, %51, %66, %81, %96 in 1 : vector<8x1xf32>, vector<8x1xf32>, vector<8x1xf32>, vector<8x1xf32>, vector<8x1xf32>, vector<8x1xf32> -> vector<8x6xf32>
    %cst_28 = arith.constant dense<0xFF800000> : vector<8xf32>
    %99 = vector.multi_reduction <maximumf>, %97, %cst_28 [1] : vector<8x6xf32> to vector<8xf32>
    %100 = vector.shape_cast %99 : vector<8xf32> to vector<8x1xf32>
    %101 = vector.broadcast %100 : vector<8x1xf32> to vector<8x6xf32>
    %102 = arith.subf %97, %101 : vector<8x6xf32>
    %103 = math.exp %102 : vector<8x6xf32>
    %cst_29 = arith.constant dense<0.000000e+00> : vector<8xf32>
    %104 = vector.multi_reduction <add>, %103, %cst_29 [1] : vector<8x6xf32> to vector<8xf32>
    %105 = vector.shape_cast %104 : vector<8xf32> to vector<8x1xf32>
    %106 = vector.broadcast %105 : vector<8x1xf32> to vector<8x6xf32>
    %107 = arith.divf %103, %106 : vector<8x6xf32>
    %108 = arith.mulf %107, %98 : vector<8x6xf32>
    %cst_30 = arith.constant dense<0.000000e+00> : vector<1x8xf32>
    %109 = tpu.matmul %5, %108, %cst_30 {dimension_numbers = #tpu.dot_dimension_numbers<[1], [1], [0], [0], [0, 0, 1, 0], [], []>} : vector<1x6xf32>, vector<8x6xf32>, vector<1x8xf32> -> vector<1x8xf32>
    %110 = vector.broadcast %6 : vector<1x1xf32> to vector<1x8xf32>
    %111 = arith.addf %109, %110 : vector<1x8xf32>
    %c0_31 = arith.constant 0 : index
    %c0_32 = arith.constant 0 : index
    %112 = vector.load %arg4[%c0_31, %c0_32] : memref<1x8xf32, #tpu.memory_space<vmem>>, vector<1x8xf32>
    tpu.vector_store %arg4[%c0_31, %c0_32], %111 {strides = array<i32>} : memref<1x8xf32, #tpu.memory_space<vmem>>, vector<1x8xf32>,
    return
  }
  func.func @transform_0(%arg0: i32) -> (i32, i32) {
    %c0_i32 = arith.constant 0 : i32
    %c0_i32_0 = arith.constant 0 : i32
    return %arg0, %c0_i32 : i32, i32
  }
  func.func @transform_1(%arg0: i32) -> (i32, i32) {
    %c0_i32 = arith.constant 0 : i32
    %c0_i32_0 = arith.constant 0 : i32
    %c0_i32_1 = arith.constant 0 : i32
    return %c0_i32, %c0_i32_0 : i32, i32
  }
  func.func @transform_2(%arg0: i32) -> (i32, i32) {
    %c0_i32 = arith.constant 0 : i32
    %c0_i32_0 = arith.constant 0 : i32
    %c0_i32_1 = arith.constant 0 : i32
    return %c0_i32, %c0_i32_0 : i32, i32
  }
  func.func @transform_3(%arg0: i32) -> (i32, i32) {
    %c0_i32 = arith.constant 0 : i32
    %c0_i32_0 = arith.constant 0 : i32
    return %arg0, %c0_i32 : i32, i32
  }
}

</mosaic_0001>

<llo_original>
// kernel: tpu_custom_call.1
$region0: #{tpu_custom_call.1}
  #allocation0 [shape = 'u32[]', space=smem, size = 0x4, offset = 0x4, fixed_abs, tag = 'smem constant byte address 0x4 - core index']
  #allocation1 [shape = 'u32[72,128]{1,0:T(1,128)}', space=vmem, size = 0x9000, scoped, tag = 'internal scratch']
  %s0 = inlined_call_operand.hbm [shape: f32[8,128], index: 0, kind: input, shape index: {}]
  %s1 = inlined_call_operand.hbm [shape: f32[6,32], index: 1, kind: input, shape index: {}]
  %s2 = inlined_call_operand.hbm [shape: f32[4,6], index: 2, kind: input, shape index: {}]
  %s3 = inlined_call_operand.hbm [shape: f32[1,8], index: 3, kind: output, shape index: {}]
  %s4 = sld [smem:[#allocation0]]
  $region34: #{tpu_custom_call.1} parent=0
    _
  %s6 = ssub.s32 1, %s4
  %s7 = scalar_select 0, %s6, %s4
  $region1: #{tpu_custom_call.1} parent=0
    #allocation2 [shape = 'u8[4096]{0}', space=vmem, size = 0x1000, scoped, tag = 'input window, operand 0, single buffered']
    #allocation3 [shape = 's32[1]{0}', space=sflag, size = 0x4, scoped, tag = 'scoped memory for tpu_custom_call.1']
    #allocation4 [shape = 's32[1]{0}', space=sflag, size = 0x4, scoped, tag = 'scoped memory for tpu_custom_call.1']
    #allocation5 [shape = 'u8[4096]{0}', space=vmem, size = 0x1000, scoped, tag = 'input window, operand 1, single buffered']
    #allocation6 [shape = 's32[1]{0}', space=sflag, size = 0x4, scoped, tag = 'scoped memory for tpu_custom_call.1']
    #allocation7 [shape = 'u8[2048]{0}', space=vmem, size = 0x800, scoped, tag = 'input window, operand 2, single buffered']
    #allocation8 [shape = 'u8[512]{0}', space=vmem, size = 0x400, scoped, tag = 'output window, operand 0, single buffered']
    %8 = vsyncpa [#allocation3], 0
    %9 = vsyncpa [#allocation6], 0
    %10 = vsyncpa [#allocation4], 0
    // Predicated region
    $region2: #{tpu_custom_call.1} parent=1 // pred_check
      _
    $region3: #{tpu_custom_call.1} parent=1 // pred_check_branch
      %12 = sbr.rel (0) target = $region5
    $region4: #{tpu_custom_call.1} parent=1 // pred_region
      %14 = vsyncadd [#allocation3], 0
      %s16 = sshll.u32 %s0, 4
      %s17 = int_to_ptr.hbm [resolvable:$true] %s16
      %s18 = sshll.u32 [#allocation2], 4
      %s19 = int_to_ptr.vmem [resolvable:$true] %s18
      %21 = dma.hbm_to_vmem [thread:$0]  %s17, 128, %s19, [#allocation3]
    $region5: #{tpu_custom_call.1} parent=1 // pred_fallthru
      _
    // Predicated region
    $region6: #{tpu_custom_call.1} parent=1 // pred_check
      _
    $region7: #{tpu_custom_call.1} parent=1 // pred_check_branch
      %23 = sbr.rel (0) target = $region9
    $region8: #{tpu_custom_call.1} parent=1 // pred_region
      %25 = vsyncadd [#allocation6], 0
      %s27 = sshll.u32 %s1, 4
      %s28 = int_to_ptr.hbm [resolvable:$true] %s27
      %s29 = sshll.u32 [#allocation5], 4
      %s30 = int_to_ptr.vmem [resolvable:$true] %s29
      %32 = dma.hbm_to_vmem [thread:$0]  %s28, 128, %s30, [#allocation6]
    $region9: #{tpu_custom_call.1} parent=1 // pred_fallthru
      _
    // Predicated region
    $region10: #{tpu_custom_call.1} parent=1 // pred_check
      _
    $region11: #{tpu_custom_call.1} parent=1 // pred_check_branch
      %34 = sbr.rel (0) target = $region13
    $region12: #{tpu_custom_call.1} parent=1 // pred_region
      %36 = vsyncadd [#allocation6], 0
      %s38 = sshll.u32 %s2, 4
      %s39 = int_to_ptr.hbm [resolvable:$true] %s38
      %s40 = sshll.u32 [#allocation7], 4
      %s41 = int_to_ptr.vmem [resolvable:$true] %s40
      %43 = dma.hbm_to_vmem [thread:$0]  %s39, 64, %s41, [#allocation6]
    $region13: #{tpu_custom_call.1} parent=1 // pred_fallthru
      _
    // Predicated region
    $region14: #{tpu_custom_call.1} parent=1 // pred_check
      _
    $region15: #{tpu_custom_call.1} parent=1 // pred_check_branch
      %45 = sbr.rel (0) target = $region17
    $region16: #{tpu_custom_call.1} parent=1 // pred_region
      %47 = dma.done [#allocation3], 128
    $region17: #{tpu_custom_call.1} parent=1 // pred_fallthru
      _
    // Predicated region
    $region18: #{tpu_custom_call.1} parent=1 // pred_check
      _
    $region19: #{tpu_custom_call.1} parent=1 // pred_check_branch
      %49 = sbr.rel (0) target = $region21
    $region20: #{tpu_custom_call.1} parent=1 // pred_region
      %51 = dma.done [#allocation6], 128
    $region21: #{tpu_custom_call.1} parent=1 // pred_fallthru
      _
    // Predicated region
    $region22: #{tpu_custom_call.1} parent=1 // pred_check
      _
    $region23: #{tpu_custom_call.1} parent=1 // pred_check_branch
      %53 = sbr.rel (0) target = $region25
    $region24: #{tpu_custom_call.1} parent=1 // pred_region
      %55 = dma.done [#allocation6], 64
    $region25: #{tpu_custom_call.1} parent=1 // pred_fallthru
      _
    %v56 = vld [vmem:[#allocation2] sm:$0xff]
    %v57 = vld [vmem:[#allocation5] sm:$0x3f]
    %v58 = vld [vmem:[#allocation7] sm:$0xf]
    %60 = vrot.lane.b32.xlu0 %v56, 96
    %v61 = vpop.permute.xlu0 %60
    %v63 = vmul.f32 %v56, %v61
    %s65 = vtos %v58
    %v66 = vstv %s65
    %vm68 = vcmask 261120
    %v70 = vsel %vm68, %v63, 0
    %v73 = vsel %vm68, %v57, 0
    %75 = vmatpush.xpose.msra.mxu0 0.0
    %76 = vmatpush.xpose.msra.mxu0 0.0
    %77 = vmatpush.xpose.msra.mxu0 0.0
    %78 = vmatpush.xpose.msra.mxu0 0.0
    %79 = vmatpush.xpose.msra.mxu0 0.0
    %80 = vmatpush.xpose.msra.mxu0 0.0
    %81 = vmatpush.xpose.msra.mxu0 0.0
    %82 = vmatpush.xpose.msra.mxu0 0.0
    %83 = vmatpush.xpose.msra.mxu0 0.0
    %84 = vmatpush.xpose.msra.mxu0 0.0
    %85 = vmatpush.xpose.msra.mxu0 0.0
    %86 = vmatpush.xpose.msra.mxu0 0.0
    %87 = vmatpush.xpose.msra.mxu0 0.0
    %88 = vmatpush.xpose.msra.mxu0 0.0
    %89 = vmatpush.xpose.msra.mxu0 0.0
    %90 = vmatpush.xpose.msra.mxu0 %v73
    %91 = vmatmul.f32.gmra.mxu0 %v70
    %v92 = vpop.f32.mrf.mxu0
    %v93 = vadd.f32 %v66, %v92
    %94 = vdwg.mxu0
    %v95 = vmax.f32 %v93, 0.0
    %v96 = vperm.slane %v58, 1
    %v97 = vmul.f32 %v95, %v96
    %vm98 = vcmask 48128
    %v99 = vsel %vm98, %v97, 0.0
    %100 = vadd.xlane.f32.xlu0 %v99
    %v101 = vpop.xlane.xlu0 %100
    %v102 = vsel %vm68, %v63, 0.0
    %103 = vadd.xlane.f32.xlu0 %v102
    %v104 = vpop.xlane.xlu0 %103
    %105 = vrot.lane.b32.xlu0 %v56, 64
    %v106 = vpop.permute.xlu0 %105
    %v108 = vmul.f32 %v56, %v106
    %109 = vrot.lane.b32.xlu0 %v58, 127
    %v110 = vpop.permute.xlu0 %109
    %s111 = vtos %v110
    %v112 = vstv %s111
    %v115 = vsel %vm68, %v108, 0
    %117 = vmatpush.xpose.msra.mxu0 0.0
    %118 = vmatpush.xpose.msra.mxu0 0.0
    %119 = vmatpush.xpose.msra.mxu0 0.0
    %120 = vmatpush.xpose.msra.mxu0 0.0
    %121 = vmatpush.xpose.msra.mxu0 0.0
    %122 = vmatpush.xpose.msra.mxu0 0.0
    %123 = vmatpush.xpose.msra.mxu0 0.0
    %124 = vmatpush.xpose.msra.mxu0 0.0
    %125 = vmatpush.xpose.msra.mxu0 0.0
    %126 = vmatpush.xpose.msra.mxu0 0.0
    %127 = vmatpush.xpose.msra.mxu0 0.0
    %128 = vmatpush.xpose.msra.mxu0 0.0
    %129 = vmatpush.xpose.msra.mxu0 0.0
    %130 = vmatpush.xpose.msra.mxu0 0.0
    %131 = vmatpush.xpose.msra.mxu0 0.0
    %132 = vmatpush.xpose.msra.mxu0 %v73
    %133 = vmatmul.f32.gmra.mxu0 %v115
    %v134 = vpop.f32.mrf.mxu0
    %v135 = vadd.f32 %v112, %v134
    %136 = vdwg.mxu0
    %v137 = vmax.f32 %v135, 0.0
    %v138 = vmul.f32 %v137, %v96
    %v139 = vsel %vm98, %v138, 0.0
    %140 = vadd.xlane.f32.xlu0 %v139
    %v141 = vpop.xlane.xlu0 %140
    %v142 = vsel %vm68, %v108, 0.0
    %143 = vadd.xlane.f32.xlu0 %v142
    %v144 = vpop.xlane.xlu0 %143
    %145 = vrot.lane.b32.xlu0 %v56, 32
    %v146 = vpop.permute.xlu0 %145
    %v148 = vmul.f32 %v56, %v146
    %149 = vrot.lane.b32.xlu0 %v58, 126
    %v150 = vpop.permute.xlu0 %149
    %s151 = vtos %v150
    %v152 = vstv %s151
    %v155 = vsel %vm68, %v148, 0
    %157 = vmatpush.xpose.msra.mxu0 0.0
    %158 = vmatpush.xpose.msra.mxu0 0.0
    %159 = vmatpush.xpose.msra.mxu0 0.0
    %160 = vmatpush.xpose.msra.mxu0 0.0
    %161 = vmatpush.xpose.msra.mxu0 0.0
    %162 = vmatpush.xpose.msra.mxu0 0.0
    %163 = vmatpush.xpose.msra.mxu0 0.0
    %164 = vmatpush.xpose.msra.mxu0 0.0
    %165 = vmatpush.xpose.msra.mxu0 0.0
    %166 = vmatpush.xpose.msra.mxu0 0.0
    %167 = vmatpush.xpose.msra.mxu0 0.0
    %168 = vmatpush.xpose.msra.mxu0 0.0
    %169 = vmatpush.xpose.msra.mxu0 0.0
    %170 = vmatpush.xpose.msra.mxu0 0.0
    %171 = vmatpush.xpose.msra.mxu0 0.0
    %172 = vmatpush.xpose.msra.mxu0 %v73
    %173 = vmatmul.f32.gmra.mxu0 %v155
    %v174 = vpop.f32.mrf.mxu0
    %v175 = vadd.f32 %v152, %v174
    %176 = vdwg.mxu0
    %v177 = vmax.f32 %v175, 0.0
    %v178 = vmul.f32 %v177, %v96
    %v179 = vsel %vm98, %v178, 0.0
    %180 = vadd.xlane.f32.xlu0 %v179
    %v181 = vpop.xlane.xlu0 %180
    %v182 = vsel %vm68, %v148, 0.0
    %183 = vadd.xlane.f32.xlu0 %v182
    %v184 = vpop.xlane.xlu0 %183
    %185 = vrot.lane.b32.xlu0 %v58, 125
    %v186 = vpop.permute.xlu0 %185
    %s187 = vtos %v186
    %v188 = vstv %s187
    %190 = vrot.lane.b32.xlu0 %v63, 96
    %v191 = vpop.permute.xlu0 %190
    %v192 = vsel %vm68, %v191, 0
    %194 = vmatpush.xpose.msra.mxu0 0.0
    %195 = vmatpush.xpose.msra.mxu0 0.0
    %196 = vmatpush.xpose.msra.mxu0 0.0
    %197 = vmatpush.xpose.msra.mxu0 0.0
    %198 = vmatpush.xpose.msra.mxu0 0.0
    %199 = vmatpush.xpose.msra.mxu0 0.0
    %200 = vmatpush.xpose.msra.mxu0 0.0
    %201 = vmatpush.xpose.msra.mxu0 0.0
    %202 = vmatpush.xpose.msra.mxu0 0.0
    %203 = vmatpush.xpose.msra.mxu0 0.0
    %204 = vmatpush.xpose.msra.mxu0 0.0
    %205 = vmatpush.xpose.msra.mxu0 0.0
    %206 = vmatpush.xpose.msra.mxu0 0.0
    %207 = vmatpush.xpose.msra.mxu0 0.0
    %208 = vmatpush.xpose.msra.mxu0 0.0
    %209 = vmatpush.xpose.msra.mxu0 %v73
    %210 = vmatmul.f32.gmra.mxu0 %v192
    %v211 = vpop.f32.mrf.mxu0
    %v212 = vadd.f32 %v188, %v211
    %213 = vdwg.mxu0
    %v214 = vmax.f32 %v212, 0.0
    %v215 = vmul.f32 %v214, %v96
    %v216 = vsel %vm98, %v215, 0.0
    %217 = vadd.xlane.f32.xlu0 %v216
    %v218 = vpop.xlane.xlu0 %217
    %v220 = vsel %vm68, %v191, 0.0
    %221 = vadd.xlane.f32.xlu0 %v220
    %v222 = vpop.xlane.xlu0 %221
    %223 = vrot.lane.b32.xlu0 %v58, 124
    %v224 = vpop.permute.xlu0 %223
    %s225 = vtos %v224
    %v226 = vstv %s225
    %228 = vrot.lane.b32.xlu0 %v108, 96
    %v229 = vpop.permute.xlu0 %228
    %v230 = vsel %vm68, %v229, 0
    %232 = vmatpush.xpose.msra.mxu0 0.0
    %233 = vmatpush.xpose.msra.mxu0 0.0
    %234 = vmatpush.xpose.msra.mxu0 0.0
    %235 = vmatpush.xpose.msra.mxu0 0.0
    %236 = vmatpush.xpose.msra.mxu0 0.0
    %237 = vmatpush.xpose.msra.mxu0 0.0
    %238 = vmatpush.xpose.msra.mxu0 0.0
    %239 = vmatpush.xpose.msra.mxu0 0.0
    %240 = vmatpush.xpose.msra.mxu0 0.0
    %241 = vmatpush.xpose.msra.mxu0 0.0
    %242 = vmatpush.xpose.msra.mxu0 0.0
    %243 = vmatpush.xpose.msra.mxu0 0.0
    %244 = vmatpush.xpose.msra.mxu0 0.0
    %245 = vmatpush.xpose.msra.mxu0 0.0
    %246 = vmatpush.xpose.msra.mxu0 0.0
    %247 = vmatpush.xpose.msra.mxu0 %v73
    %248 = vmatmul.f32.gmra.mxu0 %v230
    %v249 = vpop.f32.mrf.mxu0
    %v250 = vadd.f32 %v226, %v249
    %251 = vdwg.mxu0
    %v252 = vmax.f32 %v250, 0.0
    %v253 = vmul.f32 %v252, %v96
    %v254 = vsel %vm98, %v253, 0.0
    %255 = vadd.xlane.f32.xlu0 %v254
    %v256 = vpop.xlane.xlu0 %255
    %v258 = vsel %vm68, %v229, 0.0
    %259 = vadd.xlane.f32.xlu0 %v258
    %v260 = vpop.xlane.xlu0 %259
    %261 = vrot.lane.b32.xlu0 %v58, 123
    %v262 = vpop.permute.xlu0 %261
    %s263 = vtos %v262
    %v264 = vstv %s263
    %266 = vrot.lane.b32.xlu0 %v63, 64
    %v267 = vpop.permute.xlu0 %266
    %v268 = vsel %vm68, %v267, 0
    %270 = vmatpush.xpose.msra.mxu0 0.0
    %271 = vmatpush.xpose.msra.mxu0 0.0
    %272 = vmatpush.xpose.msra.mxu0 0.0
    %273 = vmatpush.xpose.msra.mxu0 0.0
    %274 = vmatpush.xpose.msra.mxu0 0.0
    %275 = vmatpush.xpose.msra.mxu0 0.0
    %276 = vmatpush.xpose.msra.mxu0 0.0
    %277 = vmatpush.xpose.msra.mxu0 0.0
    %278 = vmatpush.xpose.msra.mxu0 0.0
    %279 = vmatpush.xpose.msra.mxu0 0.0
    %280 = vmatpush.xpose.msra.mxu0 0.0
    %281 = vmatpush.xpose.msra.mxu0 0.0
    %282 = vmatpush.xpose.msra.mxu0 0.0
    %283 = vmatpush.xpose.msra.mxu0 0.0
    %284 = vmatpush.xpose.msra.mxu0 0.0
    %285 = vmatpush.xpose.msra.mxu0 %v73
    %286 = vmatmul.f32.gmra.mxu0 %v268
    %v287 = vpop.f32.mrf.mxu0
    %v288 = vadd.f32 %v264, %v287
    %289 = vdwg.mxu0
    %v290 = vmax.f32 %v288, 0.0
    %v291 = vmul.f32 %v290, %v96
    %v292 = vsel %vm98, %v291, 0.0
    %293 = vadd.xlane.f32.xlu0 %v292
    %v294 = vpop.xlane.xlu0 %293
    %v296 = vsel %vm68, %v267, 0.0
    %297 = vadd.xlane.f32.xlu0 %v296
    %v298 = vpop.xlane.xlu0 %297
    %vm299 = vcmask 7168
    %v300 = vsel %vm299, %v101, %v141
    %vm301 = vcmask 15360
    %v302 = vsel %vm301, %v300, %v181
    %vm303 = vcmask 23552
    %v304 = vsel %vm303, %v302, %v218
    %vm305 = vcmask 31744
    %v306 = vsel %vm305, %v304, %v256
    %vm307 = vcmask 39936
    %v308 = vsel %vm307, %v306, %v294
    %v309 = vsel %vm299, %v104, %v144
    %v310 = vsel %vm301, %v309, %v184
    %v311 = vsel %vm303, %v310, %v222
    %v312 = vsel %vm305, %v311, %v260
    %v313 = vsel %vm307, %v312, %v298
    %v314 = vsel %vm98, %v308, -inf
    %315 = vmax.xlane.f32.xlu0 %v314
    %v316 = vpop.xlane.xlu0 %315
    %v317 = vsub.f32 %v308, %v316
    %v318 = vmul.f32 %v317, 1.442695
    %v319 = vpow.pop %v318
    %v320 = vsel %vm98, %v319, 0.0
    %321 = vadd.xlane.f32.xlu0 %v320
    %v322 = vpop.xlane.xlu0 %321
    %v323 = vrcp.pop %v322
    %v324 = vmul.f32 %v322, %v323
    %v325 = vsub.f32 1.0, %v324
    %v326 = vmul.f32 %v323, %v325
    %v327 = vadd.f32 %v323, %v326
    %vm328 = vweird.f32 %v322
    %vm329 = vweird.f32 %v323
    %vm330 = vmor %vm328, %vm329
    %v331 = vsel %vm330, %v323, %v327
    %v332 = vand.u32 2147483647, %v322
    %vm333 = vcmp.eq.f32.partialorder %v332, 8.507059e+37
    %v334 = vand.u32 %v322, 2147483648
    %v335 = vor.u32 1.1754944e-38, %v334
    %v336 = vsel %vm333, %v335, %v331
    %v337 = vmul.f32 %v319, %v336
    %v338 = vmul.f32 %v337, %v313
    %339 = vset.pattern.permute.xlu0 0
    %340 = vperm.xlu0 %339, %v58
    %v341 = vpop.permute.xlu0 %340
    %v342 = vrot.slane %v58, 2
    %v343 = vrot.slane %v341, 3
    %v345 = vsel %vm98, %v342, 0
    %v348 = vsel %vm98, %v338, 0
    %350 = vmatpush.xpose.msra.mxu0 0.0
    %351 = vmatpush.xpose.msra.mxu0 0.0
    %352 = vmatpush.xpose.msra.mxu0 0.0
    %353 = vmatpush.xpose.msra.mxu0 0.0
    %354 = vmatpush.xpose.msra.mxu0 0.0
    %355 = vmatpush.xpose.msra.mxu0 0.0
    %356 = vmatpush.xpose.msra.mxu0 0.0
    %357 = vmatpush.xpose.msra.mxu0 0.0
    %358 = vmatpush.xpose.msra.mxu0 0.0
    %359 = vmatpush.xpose.msra.mxu0 0.0
    %360 = vmatpush.xpose.msra.mxu0 0.0
    %361 = vmatpush.xpose.msra.mxu0 0.0
    %362 = vmatpush.xpose.msra.mxu0 0.0
    %363 = vmatpush.xpose.msra.mxu0 0.0
    %364 = vmatpush.xpose.msra.mxu0 0.0
    %365 = vmatpush.xpose.msra.mxu0 %v348
    %366 = vmatmul.f32.gmra.mxu0 %v345
    %v367 = vpop.f32.mrf.mxu0
    %v368 = vadd.f32 %v343, %v367
    %369 = vdwg.mxu0
    %vm370 = vcmask 57344
    %371 = vst.msk [vmem:[#allocation8] sm:$0x1] %vm370, %v368
    // Predicated region
    $region26: #{tpu_custom_call.1} parent=1 // pred_check
      _
    $region27: #{tpu_custom_call.1} parent=1 // pred_check_branch
      %373 = sbr.rel (0) target = $region29
    $region28: #{tpu_custom_call.1} parent=1 // pred_region
      %375 = vsyncadd [#allocation4], 0
      %s377 = sshll.u32 [#allocation8], 4
      %s378 = int_to_ptr.vmem [resolvable:$true] %s377
      %s379 = sshll.u32 %s3, 4
      %s380 = int_to_ptr.hbm [resolvable:$true] %s379
      %382 = dma.vmem_to_hbm [thread:$0]  %s378, 16, %s380, [#allocation4]
    $region29: #{tpu_custom_call.1} parent=1 // pred_fallthru
      _
    // Predicated region
    $region30: #{tpu_custom_call.1} parent=1 // pred_check
      _
    $region31: #{tpu_custom_call.1} parent=1 // pred_check_branch
      %384 = sbr.rel (0) target = $region33
    $region32: #{tpu_custom_call.1} parent=1 // pred_region
      %386 = dma.done [#allocation4], 16
    $region33: #{tpu_custom_call.1} parent=1 // pred_fallthru
      _
    %387 = vsyncpa [#allocation3], 1
    %388 = vsyncpa [#allocation6], 1
    %389 = vsyncpa [#allocation4], 1

</llo_original>
